<compile_context>
chip_gen: v6e
topology: v6e:2x2x1
jax: 0.10.0
libtpu: 0.0.40
codegen_flags: <defaults>
</compile_context>

<pallas_src>
import functools

import jax
import jax.numpy as jnp
from jax.experimental import pallas as pl
from jax.experimental.pallas import tpu as pltpu


def _round_up(x, m):
    return ((x + m - 1) // m) * m


def center_loss_kernel(feat_ref, label_ref, centers_ref, loss_ref, *, inv_scale):
    i = pl.program_id(0)

    @pl.when(i == 0)
    def _init():
        loss_ref[...] = jnp.zeros_like(loss_ref)

    feat = feat_ref[...]        # (tb, D) f32
    labels = label_ref[...]     # (tb, 1) i32
    cent = centers_ref[...]     # (C, D) f32

    tb = feat.shape[0]
    num_classes = cent.shape[0]

    # Exact 0/1 gather matrix; padded rows carry label == -1 -> all-zero row.
    class_iota = jax.lax.broadcasted_iota(jnp.int32, (tb, num_classes), 1)
    onehot = (class_iota == labels).astype(jnp.float32)            # (tb, C)

    # centers[label[b]] gathered on the MXU: (tb, C) @ (C, D) -> (tb, D).
    centers_batch = jnp.dot(onehot, cent, preferred_element_type=jnp.float32)

    diff = feat - centers_batch
    loss_ref[...] = loss_ref[...] + jnp.sum(diff * diff)

    @pl.when(i == pl.num_programs(0) - 1)
    def _finalize():
        loss_ref[...] = loss_ref[...] * inv_scale


def center_loss_forward(feat, label, centers, *, size_average=True, block_b=128):
    """Pallas equivalent of CenterLoss(num_classes, feat_dim).forward(feat, label)."""
    batch_size = feat.shape[0]
    feat = feat.reshape(batch_size, -1).astype(jnp.float32)
    num_classes, feat_dim = centers.shape
    if feat.shape[1] != feat_dim:
        raise ValueError(
            "Center's dim: {0} should be equal to input feature's dim: {1}".format(
                feat_dim, feat.shape[1]))

    label = label.astype(jnp.int32)

    # Batch tile: multiple of 8 sublanes; pad the batch up to a whole number of tiles.
    tb = min(_round_up(block_b, 8), _round_up(batch_size, 8))
    b_pad = _round_up(batch_size, tb)
    if b_pad != batch_size:
        feat = jnp.pad(feat, ((0, b_pad - batch_size), (0, 0)))          # zero rows
        label = jnp.pad(label, (0, b_pad - batch_size), constant_values=-1)
    label2d = label.reshape(b_pad, 1)

    num_tiles = b_pad // tb
    divisor = float(batch_size) if size_average else 1.0
    inv_scale = 1.0 / (2.0 * divisor)

    kernel = functools.partial(center_loss_kernel, inv_scale=inv_scale)
    loss = pl.pallas_call(
        kernel,
        grid=(num_tiles,),
        in_specs=[
            pl.BlockSpec((tb, feat_dim), lambda i: (i, 0)),              # feat tile
            pl.BlockSpec((tb, 1), lambda i: (i, 0)),                     # labels per tile
            pl.BlockSpec((num_classes, feat_dim), lambda i: (0, 0)),     # centers (resident)
        ],
        out_specs=pl.BlockSpec((1, 1), lambda i: (0, 0)),                # resident accumulator
        out_shape=jax.ShapeDtypeStruct((1, 1), jnp.float32),
        compiler_params=pltpu.CompilerParams(
            dimension_semantics=("arbitrary",),   # grid axis is the loss-reduction axis
            vmem_limit_bytes=32 * 1024 * 1024,
        ),
    )(feat, label2d, centers.astype(jnp.float32))
    return loss[0, 0]


def init_centers(key, num_classes, feat_dim):
    # torch.nn.Parameter(torch.randn(num_classes, feat_dim))
    return jax.random.normal(key, (num_classes, feat_dim), dtype=jnp.float32)


def reference_center_loss(feat, label, centers, size_average=True):
    batch_size = feat.shape[0]
    feat = feat.reshape(batch_size, -1)
    centers_batch = centers[label]
    loss = jnp.sum((feat - centers_batch) ** 2) / 2.0
    return loss / batch_size if size_average else loss


if __name__ == "__main__":
    B, C, D = 21, 10, 32          # batch, num_classes, feat_dim (B deliberately non-multiple of 8)

    key = jax.random.PRNGKey(0)
    k_feat, k_cent, k_lab = jax.random.split(key, 3)

    feat = jax.random.normal(k_feat, (B, D), dtype=jnp.float32)
    centers = init_centers(k_cent, C, D)
    label = jax.random.randint(k_lab, (B,), 0, C, dtype=jnp.int32)

    # block_b=8 forces a multi-step grid (3 tiles) so the accumulator path is exercised.
    loss = center_loss_forward(feat, label, centers, size_average=True, block_b=8)
    loss = jax.block_until_ready(loss)

    ref = reference_center_loss(feat, label, centers, size_average=True)
    assert jnp.allclose(loss, ref, rtol=1e-4, atol=1e-4), (loss, ref)

    print("KERNEL_OK")
</pallas_src>

<mosaic_0001>
module attributes {stable_mosaic.version = 11 : i64} {
  func.func @center_loss_kernel(%arg0: i32, %arg1: memref<8x32xf32, #tpu.memory_space<vmem>>, %arg2: memref<8x1xi32, #tpu.memory_space<vmem>>, %arg3: memref<10x32xf32, #tpu.memory_space<vmem>>, %arg4: memref<1x1xf32, #tpu.memory_space<vmem>>) attributes {dimension_semantics = [#tpu.dimension_semantics<arbitrary>], iteration_bounds = array<i64: 3>, scalar_prefetch = 0 : i64, scratch_operands = 0 : i64, tpu.core_type = #tpu.core_type<tc>, window_params = [{transform_indices = @transform_0, window_bounds = array<i64: 8, 32>}, {transform_indices = @transform_1, window_bounds = array<i64: 8, 1>}, {pipeline_mode = #tpu.pipeline_mode<synchronous>, transform_indices = @transform_2, window_bounds = array<i64: 10, 32>}, {pipeline_mode = #tpu.pipeline_mode<synchronous>, transform_indices = @transform_3, window_bounds = array<i64: 1, 1>}]} {
    %c0_i32 = arith.constant 0 : i32
    %0 = arith.cmpi eq, %arg0, %c0_i32 : i32
    %1 = arith.extui %0 : i1 to i32
    %c0_i32_0 = arith.constant 0 : i32
    %2 = arith.cmpi ne, %1, %c0_i32_0 : i32
    scf.if %2 {
      %cst_12 = arith.constant 0.000000e+00 : f32
      %25 = vector.broadcast %cst_12 : f32 to vector<1x1xf32>
      %c0_13 = arith.constant 0 : index
      %c0_14 = arith.constant 0 : index
      %26 = vector.load %arg4[%c0_13, %c0_14] : memref<1x1xf32, #tpu.memory_space<vmem>>, vector<1x1xf32>
      tpu.vector_store %arg4[%c0_13, %c0_14], %25 {strides = array<i32>} : memref<1x1xf32, #tpu.memory_space<vmem>>, vector<1x1xf32>,
    } else {
    }
    %c0 = arith.constant 0 : index
    %c0_1 = arith.constant 0 : index
    %3 = vector.load %arg1[%c0, %c0_1] : memref<8x32xf32, #tpu.memory_space<vmem>>, vector<8x32xf32>
    %c0_2 = arith.constant 0 : index
    %c0_3 = arith.constant 0 : index
    %4 = vector.load %arg2[%c0_2, %c0_3] : memref<8x1xi32, #tpu.memory_space<vmem>>, vector<8x1xi32>
    %c0_4 = arith.constant 0 : index
    %c0_5 = arith.constant 0 : index
    %5 = vector.load %arg3[%c0_4, %c0_5] : memref<10x32xf32, #tpu.memory_space<vmem>>, vector<10x32xf32>
    %6 = tpu.iota {dimensions = array<i32: 1>} : vector<8x10xi32>
    %7 = vector.broadcast %4 : vector<8x1xi32> to vector<8x10xi32>
    %8 = arith.cmpi eq, %6, %7 : vector<8x10xi32>
    %9 = arith.extui %8 : vector<8x10xi1> to vector<8x10xi32>
    %10 = arith.sitofp %9 : vector<8x10xi32> to vector<8x10xf32>
    %cst = arith.constant dense<0.000000e+00> : vector<8x32xf32>
    %11 = tpu.matmul %10, %5, %cst {dimension_numbers = #tpu.dot_dimension_numbers<[1], [0], [0], [1], [0, 0, 1, 1], [], []>} : vector<8x10xf32>, vector<10x32xf32>, vector<8x32xf32> -> vector<8x32xf32>
    %12 = arith.subf %3, %11 : vector<8x32xf32>
    %c0_6 = arith.constant 0 : index
    %c0_7 = arith.constant 0 : index
    %13 = vector.load %arg4[%c0_6, %c0_7] : memref<1x1xf32, #tpu.memory_space<vmem>>, vector<1x1xf32>
    %14 = arith.mulf %12, %12 : vector<8x32xf32>
    %15 = vector.shape_cast %14 : vector<8x32xf32> to vector<1x8x32xf32>
    %cst_8 = arith.constant dense<0.000000e+00> : vector<1xf32>
    %16 = vector.multi_reduction <add>, %15, %cst_8 [1, 2] : vector<1x8x32xf32> to vector<1xf32>
    %17 = vector.shape_cast %16 : vector<1xf32> to vector<1x1x1xf32>
    %18 = vector.extract %17[0, 0, 0] : f32 from vector<1x1x1xf32>
    %19 = vector.broadcast %18 : f32 to vector<1x1xf32>
    %20 = arith.addf %13, %19 : vector<1x1xf32>
    %c0_9 = arith.constant 0 : index
    %c0_10 = arith.constant 0 : index
    %21 = vector.load %arg4[%c0_9, %c0_10] : memref<1x1xf32, #tpu.memory_space<vmem>>, vector<1x1xf32>
    tpu.vector_store %arg4[%c0_9, %c0_10], %20 {strides = array<i32>} : memref<1x1xf32, #tpu.memory_space<vmem>>, vector<1x1xf32>,
    %c2_i32 = arith.constant 2 : i32
    %22 = arith.cmpi eq, %arg0, %c2_i32 : i32
    %23 = arith.extui %22 : i1 to i32
    %c0_i32_11 = arith.constant 0 : i32
    %24 = arith.cmpi ne, %23, %c0_i32_11 : i32
    scf.if %24 {
      %c0_12 = arith.constant 0 : index
      %c0_13 = arith.constant 0 : index
      %25 = vector.load %arg4[%c0_12, %c0_13] : memref<1x1xf32, #tpu.memory_space<vmem>>, vector<1x1xf32>
      %cst_14 = arith.constant 0.0238095243 : f32
      %26 = vector.broadcast %cst_14 : f32 to vector<1x1xf32>
      %27 = arith.mulf %25, %26 : vector<1x1xf32>
      %c0_15 = arith.constant 0 : index
      %c0_16 = arith.constant 0 : index
      %28 = vector.load %arg4[%c0_15, %c0_16] : memref<1x1xf32, #tpu.memory_space<vmem>>, vector<1x1xf32>
      tpu.vector_store %arg4[%c0_15, %c0_16], %27 {strides = array<i32>} : memref<1x1xf32, #tpu.memory_space<vmem>>, vector<1x1xf32>,
    } else {
    }
    return
  }
  func.func @transform_0(%arg0: i32) -> (i32, i32) {
    %c0_i32 = arith.constant 0 : i32
    %c0_i32_0 = arith.constant 0 : i32
    return %arg0, %c0_i32 : i32, i32
  }
  func.func @transform_1(%arg0: i32) -> (i32, i32) {
    %c0_i32 = arith.constant 0 : i32
    %c0_i32_0 = arith.constant 0 : i32
    return %arg0, %c0_i32 : i32, i32
  }
  func.func @transform_2(%arg0: i32) -> (i32, i32) {
    %c0_i32 = arith.constant 0 : i32
    %c0_i32_0 = arith.constant 0 : i32
    %c0_i32_1 = arith.constant 0 : i32
    return %c0_i32, %c0_i32_0 : i32, i32
  }
  func.func @transform_3(%arg0: i32) -> (i32, i32) {
    %c0_i32 = arith.constant 0 : i32
    %c0_i32_0 = arith.constant 0 : i32
    %c0_i32_1 = arith.constant 0 : i32
    return %c0_i32, %c0_i32_0 : i32, i32
  }
}

</mosaic_0001>

<llo_original>
// kernel: tpu_custom_call.1
$region0: #{tpu_custom_call.1}
  #allocation0 [shape = 'u32[]', space=smem, size = 0x4, offset = 0x4, fixed_abs, tag = 'smem constant byte address 0x4 - core index']
  #allocation1 [shape = 'u32[144,128]{1,0:T(1,128)}', space=vmem, size = 0x12000, scoped, tag = 'internal scratch']
  %s0 = inlined_call_operand.vmem [shape: f32[24,32], index: 0, kind: input, shape index: {}]
  %s1 = inlined_call_operand.vmem [shape: s32[24,1], index: 1, kind: input, shape index: {}]
  %s2 = inlined_call_operand.hbm [shape: f32[10,32], index: 2, kind: input, shape index: {}]
  %s3 = inlined_call_operand.hbm [shape: f32[1,1], index: 3, kind: output, shape index: {}]
  %s4 = sld [smem:[#allocation0]]
  $region57: #{tpu_custom_call.1} parent=0
    _
  %s6 = ssub.s32 1, %s4
  %s7 = scalar_select 0, %s6, %s4
  $region1: #{tpu_custom_call.1} parent=0
    #allocation2 [shape = 'u8[8192]{0}', space=vmem, size = 0x2000, scoped, tag = 'input window, operand 2, single buffered']
    #allocation3 [shape = 's32[2]{0}', space=sflag, size = 0x8, scoped, tag = 'scoped memory for tpu_custom_call.1']
    #allocation4 [shape = 's32[2]{0}', space=sflag, size = 0x8, scoped, tag = 'scoped memory for tpu_custom_call.1']
    #allocation5 [shape = 'u8[512]{0}', space=vmem, size = 0x400, scoped, tag = 'output window, operand 0, single buffered']
    %8 = vsyncpa [#allocation3], 0
    %9 = vsyncpa [#allocation4], 0
    loop: start=0, step=1, limit=5
    $region2: #{tpu_custom_call.1} parent=1 // loop_pre_header
      _
    $region3: #{tpu_custom_call.1} parent=1 // loop_header
      %s11 = sphi 0, %s15
      %p12 = scmp.ge.s32.totalorder %s11, 5
      %s21 = sphi 0, %s23
      %s24 = sphi 0, %s21
      %s25 = sphi 0, %s24
      %s41 = sphi 0, %s25
      %s47 = sphi 0, %s49
      %s50 = sphi 0, %s47
      %s51 = sphi 0, %s50
      %s67 = sphi 0, %s51
      %s71 = sphi 0, %s71
      %s73 = sphi 0, %s71
      %s74 = sphi 0, %s73
      %s88 = sphi 0, %s74
      %s92 = sphi 0, %s92
      %s94 = sphi 0, %s92
      %s95 = sphi 0, %s94
      %s109 = sphi 0, %s95
    $region4: #{tpu_custom_call.1} parent=1 // loop_header_branch
      %14 = sbr.rel (%p12) target = $region8
    $region5: #{tpu_custom_call.1} parent=1 // loop_body
      %s16 = ssub.s32 %s11, 1
      %s17 = ssub.s32 %s11, 2
      %s18 = sadd.s32 %s11, 1
      %s19 = ssub.s32 %s11, %s18
      %p20 = scmp.eq.s32.totalorder %s19, 0
      %s22 = sadd.s32 %s21, 1
      %s23 = scalar_select %p20, %s21, %s22
      %p26 = pneg %p20
      %p27 = scmp.eq.s32.totalorder %s11, 2
      %p28 = por %p26, %p27
      %p29 = scmp.ne.s32.totalorder %s21, %s24
      %p30 = scmp.eq.s32.totalorder %s11, 0
      %p31 = por %p29, %p30
      %p32 = scmp.ne.s32.totalorder %s21, %s24
      %p33 = scmp.eq.s32.totalorder %s16, 2
      %p34 = por %p32, %p33
      %p35 = scmp.ne.s32.totalorder %s24, %s25
      %p36 = scmp.eq.s32.totalorder %s16, 0
      %p37 = por %p35, %p36
      %p38 = scmp.ne.s32.totalorder %s24, %s25
      %p39 = scmp.eq.s32.totalorder %s17, 2
      %p40 = por %p38, %p39
      %p42 = scmp.ne.s32.totalorder %s25, %s41
      %p43 = scmp.eq.s32.totalorder %s17, 0
      %p44 = por %p42, %p43
      %s45 = ssub.s32 %s11, %s18
      %p46 = scmp.eq.s32.totalorder %s45, 0
      %s48 = sadd.s32 %s47, 1
      %s49 = scalar_select %p46, %s47, %s48
      %p52 = pneg %p46
      %p53 = scmp.eq.s32.totalorder %s11, 2
      %p54 = por %p52, %p53
      %p55 = scmp.ne.s32.totalorder %s47, %s50
      %p56 = scmp.eq.s32.totalorder %s11, 0
      %p57 = por %p55, %p56
      %p58 = scmp.ne.s32.totalorder %s47, %s50
      %p59 = scmp.eq.s32.totalorder %s16, 2
      %p60 = por %p58, %p59
      %p61 = scmp.ne.s32.totalorder %s50, %s51
      %p62 = scmp.eq.s32.totalorder %s16, 0
      %p63 = por %p61, %p62
      %p64 = scmp.ne.s32.totalorder %s50, %s51
      %p65 = scmp.eq.s32.totalorder %s17, 2
      %p66 = por %p64, %p65
      %p68 = scmp.ne.s32.totalorder %s51, %s67
      %p69 = scmp.eq.s32.totalorder %s17, 0
      %p70 = por %p68, %p69
      %s72 = sadd.s32 %s71, 1
      %p75 = scmp.eq.s32.totalorder %s11, 2
      %p76 = scmp.ne.s32.totalorder %s71, %s73
      %p77 = scmp.eq.s32.totalorder %s11, 0
      %p78 = por %p76, %p77
      %p79 = scmp.ne.s32.totalorder %s71, %s73
      %p80 = scmp.eq.s32.totalorder %s16, 2
      %p81 = por %p79, %p80
      %p82 = scmp.ne.s32.totalorder %s73, %s74
      %p83 = scmp.eq.s32.totalorder %s16, 0
      %p84 = por %p82, %p83
      %p85 = scmp.ne.s32.totalorder %s73, %s74
      %p86 = scmp.eq.s32.totalorder %s17, 2
      %p87 = por %p85, %p86
      %p89 = scmp.ne.s32.totalorder %s74, %s88
      %p90 = scmp.eq.s32.totalorder %s17, 0
      %p91 = por %p89, %p90
      %s93 = sadd.s32 %s92, 1
      %p96 = scmp.eq.s32.totalorder %s11, 2
      %p97 = scmp.ne.s32.totalorder %s92, %s94
      %p98 = scmp.eq.s32.totalorder %s11, 0
      %p99 = por %p97, %p98
      %p100 = scmp.ne.s32.totalorder %s92, %s94
      %p101 = scmp.eq.s32.totalorder %s16, 2
      %p102 = por %p100, %p101
      %p103 = scmp.ne.s32.totalorder %s94, %s95
      %p104 = scmp.eq.s32.totalorder %s16, 0
      %p105 = por %p103, %p104
      %p106 = scmp.ne.s32.totalorder %s94, %s95
      %p107 = scmp.eq.s32.totalorder %s17, 2
      %p108 = por %p106, %p107
      %p110 = scmp.ne.s32.totalorder %s95, %s109
      %p111 = scmp.eq.s32.totalorder %s17, 0
      %p112 = por %p110, %p111
      %p113 = scmp.le.s32.totalorder 1, %s11
      %p114 = scmp.lt.s32.totalorder %s11, 4
      %p115 = pnand %p113, %p114
      %p116 = pneg %p115
      // Predicated region
      $region9: #{tpu_custom_call.1} parent=5 // pred_check
        _
      $region10: #{tpu_custom_call.1} parent=5 // pred_check_branch
        %118 = sbr.rel (%p115) target = $region12
      $region11: #{tpu_custom_call.1} parent=5 // pred_region
        %s119 = ssub.s32 %s11, 1
        // Predicated region
        $region13: #{tpu_custom_call.1} parent=11 // pred_check
          %p120 = pneg %p84
        $region14: #{tpu_custom_call.1} parent=11 // pred_check_branch
          %122 = sbr.rel (%p120) target = $region16
        $region15: #{tpu_custom_call.1} parent=11 // pred_region
          %s124 = ssub.s32 256, 256
          %125 = vsyncadd [#allocation3], %s124
          %s126 = sshll.u32 [#allocation2], 4
          %s127 = int_to_ptr.vmem [resolvable:$true] %s126
          %132 = dma.hbm_to_vmem [thread:$0]  %s2, 256, %s127, [#allocation3], 128, 128, 8
        $region16: #{tpu_custom_call.1} parent=11 // pred_fallthru
          _
      $region12: #{tpu_custom_call.1} parent=5 // pred_fallthru
        _
      %p133 = scmp.lt.s32.totalorder %s11, 3
      // Predicated region
      $region17: #{tpu_custom_call.1} parent=5 // pred_check
        %p134 = pneg %p133
      $region18: #{tpu_custom_call.1} parent=5 // pred_check_branch
        %136 = sbr.rel (%p134) target = $region20
      $region19: #{tpu_custom_call.1} parent=5 // pred_region
        // Predicated region
        $region21: #{tpu_custom_call.1} parent=19 // pred_check
          %p137 = pneg %p31
        $region22: #{tpu_custom_call.1} parent=19 // pred_check_branch
          %139 = sbr.rel (%p137) target = $region24
        $region23: #{tpu_custom_call.1} parent=19 // pred_region
          %p140 = scmp.lt.s32.totalorder %s11, 2
          %s141 = scalar_select %p140, %s11, 2
          %s142 = smul.addr %s141, 8
          %s143 = scalar_lea.vmem %s0, %s142
        $region24: #{tpu_custom_call.1} parent=19 // pred_fallthru
          _
        // Predicated region
        $region25: #{tpu_custom_call.1} parent=19 // pred_check
          %p144 = pneg %p57
        $region26: #{tpu_custom_call.1} parent=19 // pred_check_branch
          %146 = sbr.rel (%p144) target = $region28
        $region27: #{tpu_custom_call.1} parent=19 // pred_region
          %p147 = scmp.lt.s32.totalorder %s11, 2
          %s148 = scalar_select %p147, %s11, 2
          %s149 = smul.addr %s148, 8
          %s150 = scalar_lea.vmem %s1, %s149
        $region28: #{tpu_custom_call.1} parent=19 // pred_fallthru
          _
      $region20: #{tpu_custom_call.1} parent=5 // pred_fallthru
        _
      %p151 = scmp.le.s32.totalorder 1, %s11
      %p152 = scmp.lt.s32.totalorder %s11, 4
      %p153 = pnand %p151, %p152
      %p154 = pneg %p153
      // Predicated region
      $region29: #{tpu_custom_call.1} parent=5 // pred_check
        _
      $region30: #{tpu_custom_call.1} parent=5 // pred_check_branch
        %156 = sbr.rel (%p153) target = $region32
      $region31: #{tpu_custom_call.1} parent=5 // pred_region
        %s157 = ssub.s32 %s11, 1
        // Predicated region
        $region33: #{tpu_custom_call.1} parent=31 // pred_check
          %p158 = pneg %p84
        $region34: #{tpu_custom_call.1} parent=31 // pred_check_branch
          %160 = sbr.rel (%p158) target = $region36
        $region35: #{tpu_custom_call.1} parent=31 // pred_region
          %161 = dma.done [#allocation3], 256
        $region36: #{tpu_custom_call.1} parent=31 // pred_fallthru
          _
        %p162 = scmp.lt.s32.totalorder %s16, 2
        %s163 = scalar_select %p162, %s16, 2
        %s164 = smul.addr %s163, 8
        %s165 = scalar_lea.vmem %s0, %s164
        %p166 = pneg %p37
        %p167 = pneg %p34
        %p168 = scmp.lt.s32.totalorder %s16, 2
        %s169 = scalar_select %p168, %s16, 2
        %s170 = smul.addr %s169, 8
        %s171 = scalar_lea.vmem %s1, %s170
        %p172 = pneg %p63
        %p173 = pneg %p60
        %p174 = pneg %p84
        %p175 = pneg %p81
        %p176 = pneg %p105
        %p177 = pneg %p102
        %p178 = scmp.lt.s32.totalorder %s16, 2
        %s179 = scalar_select %p178, %s16, 2
        %s180 = smul.addr %s179, 8
        %s181 = scalar_lea.vmem %s0, %s180
        %p182 = scmp.lt.s32.totalorder %s16, 2
        %s183 = scalar_select %p182, %s16, 2
        %s184 = smul.addr %s183, 8
        %s185 = scalar_lea.vmem %s1, %s184
        %p186 = scmp.eq.s32.totalorder %s16, 0
        // Predicated region
        $region37: #{tpu_custom_call.1} parent=31 // pred_check
          %p187 = pneg %p186
        $region38: #{tpu_custom_call.1} parent=31 // pred_check_branch
          %189 = sbr.rel (%p187) target = $region40
        $region39: #{tpu_custom_call.1} parent=31 // pred_region
          %vm190 = vcmask 0
          %191 = vst.msk [vmem:[#allocation5] sm:$0x1] %vm190, 0.0
        $region40: #{tpu_custom_call.1} parent=31 // pred_fallthru
          _
        %v192 = vld [vmem:[%s181] sm:$0xff]
        %v193 = vld [vmem:[%s185] sm:$0xff]
        %v194 = vld [vmem:[#allocation2] sm:$0xff]
        %v195 = vld [vmem:[#allocation2 + $0x8] sm:$0x3]
        %v196 = vlaneseq
        %v197 = vand.u32 %v196, 127
        %198 = vset.pattern.permute.xlu0 0
        %199 = vperm.xlu0 %198, %v193
        %v200 = vpop.permute.xlu0 %199
        %vm201 = vcmp.eq.s32.totalorder %v197, %v200
        %v202 = vsel %vm201, 1, 0
        %v203 = vcvt.s32.f32 %v202
        %vm204 = vcmask 80896
        %v206 = vsel %vm204, %v203, 0
        %vm208 = vcmask 1041408
        %v210 = vsel %vm208, %v195, 0
        %212 = vmatprep.subr.mxu0 0.0
        %213 = vmatpush1.msra.mxu0 0.0
        %214 = vmatprep.subr.mxu0 0.0
        %215 = vmatpush1.msra.mxu0 0.0
        %216 = vmatprep.subr.mxu0 0.0
        %217 = vmatpush1.msra.mxu0 0.0
        %218 = vmatprep.subr.mxu0 0.0
        %219 = vmatpush1.msra.mxu0 0.0
        %220 = vmatprep.subr.mxu0 0.0
        %221 = vmatpush1.msra.mxu0 0.0
        %222 = vmatprep.subr.mxu0 0.0
        %223 = vmatpush1.msra.mxu0 0.0
        %224 = vmatprep.subr.mxu0 0.0
        %225 = vmatpush1.msra.mxu0 0.0
        %226 = vmatprep.subr.mxu0 0.0
        %227 = vmatpush1.msra.mxu0 0.0
        %228 = vmatprep.subr.mxu0 0.0
        %229 = vmatpush1.msra.mxu0 0.0
        %230 = vmatprep.subr.mxu0 0.0
        %231 = vmatpush1.msra.mxu0 0.0
        %232 = vmatprep.subr.mxu0 0.0
        %233 = vmatpush1.msra.mxu0 0.0
        %234 = vmatprep.subr.mxu0 0.0
        %235 = vmatpush1.msra.mxu0 0.0
        %236 = vmatprep.subr.mxu0 0.0
        %237 = vmatpush1.msra.mxu0 0.0
        %238 = vmatprep.subr.mxu0 0.0
        %239 = vmatpush1.msra.mxu0 0.0
        %240 = vmatprep.subr.mxu0 0.0
        %241 = vmatpush1.msra.mxu0 %v210
        %242 = vmatprep.subr.mxu0 0.0
        %243 = vmatpush1.msra.mxu0 %v194
        %244 = vmatprep.subr.mxu0 0.0
        %245 = vmatpush2.msra.mxu0 0.0
        %246 = vmatprep.subr.mxu0 0.0
        %247 = vmatpush2.msra.mxu0 0.0
        %248 = vmatprep.subr.mxu0 0.0
        %249 = vmatpush2.msra.mxu0 0.0
        %250 = vmatprep.subr.mxu0 0.0
        %251 = vmatpush2.msra.mxu0 0.0
        %252 = vmatprep.subr.mxu0 0.0
        %253 = vmatpush2.msra.mxu0 0.0
        %254 = vmatprep.subr.mxu0 0.0
        %255 = vmatpush2.msra.mxu0 0.0
        %256 = vmatprep.subr.mxu0 0.0
        %257 = vmatpush2.msra.mxu0 0.0
        %258 = vmatprep.subr.mxu0 0.0
        %259 = vmatpush2.msra.mxu0 0.0
        %260 = vmatprep.subr.mxu0 0.0
        %261 = vmatpush2.msra.mxu0 0.0
        %262 = vmatprep.subr.mxu0 0.0
        %263 = vmatpush2.msra.mxu0 0.0
        %264 = vmatprep.subr.mxu0 0.0
        %265 = vmatpush2.msra.mxu0 0.0
        %266 = vmatprep.subr.mxu0 0.0
        %267 = vmatpush2.msra.mxu0 0.0
        %268 = vmatprep.subr.mxu0 0.0
        %269 = vmatpush2.msra.mxu0 0.0
        %270 = vmatprep.subr.mxu0 0.0
        %271 = vmatpush2.msra.mxu0 0.0
        %272 = vmatprep.subr.mxu0 0.0
        %273 = vmatpush2.msra.mxu0 0.0
        %274 = vmatprep.subr.mxu0 0.0
        %275 = vmatpush2.msra.mxu0 0.0
        %276 = vmatprep.mubr.f32.mxu0 0.0
        %277 = vmatmul.mubr.f32.gmra.mxu0 %v206
        %v278 = vpop.f32.mrf.mxu0
        %v279 = vadd.f32 0.0, %v278
        %v280 = vpop.f32.mrf.mxu0
        %281 = vdwg.mxu0
        %v282 = vsub.f32 %v192, %v279
        %v283 = vld [vmem:[#allocation5] sm:$0x1]
        %v284 = vmul.f32 %v282, %v282
        %vm285 = vcmask 261120
        %v286 = vsel %vm285, %v284, 0.0
        %287 = vadd.xlane.f32.xlu0 %v286
        %v288 = vpop.xlane.xlu0 %287
        %v289 = vrot.slane %v288, 4
        %v290 = vadd.f32 %v288, %v289
        %v291 = vrot.slane %v290, 2
        %v292 = vadd.f32 %v290, %v291
        %v293 = vrot.slane %v292, 1
        %v294 = vadd.f32 %v292, %v293
        %s295 = vtos %v294
        %v296 = vstv %s295
        %v297 = vadd.f32 %v283, %v296
        %vm298 = vcmask 0
        %299 = vst.msk [vmem:[#allocation5] sm:$0x1] %vm298, %v297
        %p300 = scmp.eq.s32.totalorder %s16, 2
        // Predicated region
        $region41: #{tpu_custom_call.1} parent=31 // pred_check
          %p301 = pneg %p300
        $region42: #{tpu_custom_call.1} parent=31 // pred_check_branch
          %303 = sbr.rel (%p301) target = $region44
        $region43: #{tpu_custom_call.1} parent=31 // pred_region
          %v304 = vld [vmem:[#allocation5] sm:$0x1]
          %v305 = vmul.f32 %v304, 0.023809524
          %306 = vst.msk [vmem:[#allocation5] sm:$0x1] %vm298, %v305
        $region44: #{tpu_custom_call.1} parent=31 // pred_fallthru
          _
        // Predicated region
        $region45: #{tpu_custom_call.1} parent=31 // pred_check
          %p307 = pneg %p102
        $region46: #{tpu_custom_call.1} parent=31 // pred_check_branch
          %309 = sbr.rel (%p307) target = $region48
        $region47: #{tpu_custom_call.1} parent=31 // pred_region
          %s311 = ssub.s32 16, 16
          %312 = vsyncadd [#allocation4], %s311
          %s314 = sshll.u32 [#allocation5], 4
          %s315 = int_to_ptr.vmem [resolvable:$true] %s314
          %317 = dma.vmem_to_hbm [thread:$0]  %s315, 16, %s3, [#allocation4]
        $region48: #{tpu_custom_call.1} parent=31 // pred_fallthru
          _
        // Predicated region
        $region49: #{tpu_custom_call.1} parent=31 // pred_check
          %p318 = pneg %p102
        $region50: #{tpu_custom_call.1} parent=31 // pred_check_branch
          %320 = sbr.rel (%p318) target = $region52
        $region51: #{tpu_custom_call.1} parent=31 // pred_region
          %321 = dma.done [#allocation4], 16
        $region52: #{tpu_custom_call.1} parent=31 // pred_fallthru
          _
      $region32: #{tpu_custom_call.1} parent=5 // pred_fallthru
        _
      %p322 = scmp.le.s32.totalorder 2, %s11
      // Predicated region
      $region53: #{tpu_custom_call.1} parent=5 // pred_check
        %p323 = pneg %p322
      $region54: #{tpu_custom_call.1} parent=5 // pred_check_branch
        %325 = sbr.rel (%p323) target = $region56
      $region55: #{tpu_custom_call.1} parent=5 // pred_region
        %s326 = ssub.s32 %s11, 2
      $region56: #{tpu_custom_call.1} parent=5 // pred_fallthru
        _
    $region6: #{tpu_custom_call.1} parent=1 // loop_footer
      %s15 = sadd.s32 1, %s11
    $region7: #{tpu_custom_call.1} parent=1 // loop_footer_branch
      %10 = sbr.rel target = $region3
    $region8: #{tpu_custom_call.1} parent=1 // loop_exit
      _
    %327 = vsyncpa [#allocation3], 1
    %s328 = scalar_lea.sflag [#allocation3], 1
    %329 = vsyncpa %s328, 1
    %330 = vsyncpa [#allocation4], 1
    %s331 = scalar_lea.sflag [#allocation4], 1
    %332 = vsyncpa %s331, 1

</llo_original>
